<compile_context>
chip_gen: v5e
topology: v5e:2x2
jax: 0.10.0
libtpu: 0.0.40
codegen_flags: <defaults>
</compile_context>

<pallas_src>
import functools

import jax
import jax.numpy as jnp
from jax.experimental import pallas as pl
from jax.experimental.pallas import tpu as pltpu

ACTION_SCALE = 1.0  # policy.action_scale


def pathwise_loss_kernel(
    state_ref,      # (S, TILE_B)   f32   state^T tile (batch on lanes)
    eps_ref,        # (A, TILE_B)   f32   rsample noise^T tile
    wt_trunk_ref,   # (2H, S)       mxu   rows 0:H = W1^T, rows H:2H = Wc1s^T
    wt_heads_ref,   # (2A, H)       mxu   rows 0:A = Wm^T, rows A:2A = Ws^T
    wt_c1a_ref,     # (H, A)        mxu   Wc1a^T
    vec_ref,        # (3H+2A+1, 1)  f32   [b1 | bc1 | bm | bs | wc2 | bc2] stacked as rows
    loss_ref,       # (1, TILE_B)   f32   lane-dense output
    *,
    H: int,
    A: int,
):
    mxu_dt = wt_trunk_ref.dtype            # f32 or bf16 (MXU operand dtype)
    state = state_ref[...]                 # f32
    eps = eps_ref[...]                     # f32

    # Static row slices of the packed vector buffer (one DMA instead of six).
    b1 = vec_ref[0:H, :]                              # (H, 1)
    bc1 = vec_ref[H:2 * H, :]                         # (H, 1)
    b_heads = vec_ref[2 * H:2 * H + 2 * A, :]         # (2A, 1)  = [bm ; bs]
    wc2 = vec_ref[2 * H + 2 * A:3 * H + 2 * A, :]     # (H, 1)
    bc2 = vec_ref[3 * H + 2 * A:3 * H + 2 * A + 1, :] # (1, 1)

    # ---- fused policy trunk + critic state-path: ONE MXU push for both ----
    trunk = jnp.dot(wt_trunk_ref[...], state.astype(mxu_dt),
                    preferred_element_type=jnp.float32)          # (2H, TILE_B) f32
    h = jnp.tanh(trunk[:H, :] + b1)                               # policy hidden (EUP tanh, f32)
    hc_state = trunk[H:, :]                                       # critic state-path pre-act

    # ---- fused Gaussian heads (mean | log_std): ONE MXU push ----
    heads = jnp.dot(wt_heads_ref[...], h.astype(mxu_dt),
                    preferred_element_type=jnp.float32) + b_heads  # (2A, TILE_B) f32
    mean = heads[:A, :]
    std = jnp.exp(heads[A:, :])                                    # EUP exp, f32

    # ---- rsample (reparameterization) + clamp(-1, 1) + action_scale (VPU, f32) ----
    action = ACTION_SCALE * jnp.clip(mean + std * eps, -1.0, 1.0)  # (A, TILE_B)

    # ---- critic layer 1 (action path) + ReLU ----
    hc = jnp.maximum(
        hc_state
        + jnp.dot(wt_c1a_ref[...], action.astype(mxu_dt),
                  preferred_element_type=jnp.float32)
        + bc1,
        0.0)                                                       # (H, TILE_B) f32

    # ---- critic output: N=1 matmul replaced by VPU multiply + sublane reduce ----
    q = jnp.sum(hc * wc2, axis=0, keepdims=True) + bc2             # (1, TILE_B)

    # ---- Loss(policy_loss = -q): lane-dense store (batch on 128-lane axis) ----
    loss_ref[...] = -q


def pathwise_loss(state, eps, packed, *, tile_b=256):
    """state: (B, S) f32, eps: (B, A) f32, packed: output of pack_params. Returns (B, 1) f32."""
    wt_trunk, wt_heads, wt_c1a, vec = packed
    B, S = state.shape
    A = eps.shape[1]
    H = wt_c1a.shape[0]

    tile_b = min(tile_b, B)
    # TODO(synk): pad the batch to a multiple of tile_b for ragged batch sizes.
    assert B % tile_b == 0, "batch must be a multiple of tile_b"
    num_tiles = B // tile_b

    # Feature-major layout: batch goes on the 128-lane axis (wrapper-side layout plumbing).
    state_t = state.T   # (S, B)
    eps_t = eps.T       # (A, B)

    kernel = functools.partial(pathwise_loss_kernel, H=H, A=A)

    def resident(shape):
        # Whole array, same block every grid step -> DMA'd once, stays VMEM-resident.
        return pl.BlockSpec(shape, lambda i: (0, 0))

    out = pl.pallas_call(
        kernel,
        out_shape=jax.ShapeDtypeStruct((1, B), jnp.float32),
        grid=(num_tiles,),
        in_specs=[
            pl.BlockSpec((S, tile_b), lambda i: (0, i)),   # state^T batch tile
            pl.BlockSpec((A, tile_b), lambda i: (0, i)),   # eps^T batch tile
            resident(wt_trunk.shape),
            resident(wt_heads.shape),
            resident(wt_c1a.shape),
            resident(vec.shape),
        ],
        out_specs=pl.BlockSpec((1, tile_b), lambda i: (0, i)),   # lane-dense loss slab
        compiler_params=pltpu.CompilerParams(
            # v7x: both TensorCores share the batch axis; no-op on v5e/v6e.
            dimension_semantics=("parallel",),
            # VMEM budget: resident weights + 2x(state, eps, out) tiles are well under the
            # 32 MiB scoped limit even on v7x (64 MiB physical). Raise vmem_limit_bytes
            # here only if hidden sizes grow into the thousands.
        ),
    )(state_t, eps_t, wt_trunk, wt_heads, wt_c1a, vec)

    return out.reshape(B, 1)


def make_params(key, state_dim, action_dim, hidden):
    ks = jax.random.split(key, 11)

    def init(k, shape, scale=0.1):
        return (scale * jax.random.normal(k, shape)).astype(jnp.float32)

    w1 = init(ks[0], (state_dim, hidden))
    b1 = init(ks[1], (1, hidden))
    wm = init(ks[2], (hidden, action_dim))
    bm = init(ks[3], (1, action_dim))
    ws = init(ks[4], (hidden, action_dim))
    bs = init(ks[5], (1, action_dim))
    wc1s = init(ks[6], (state_dim, hidden))
    wc1a = init(ks[7], (action_dim, hidden))
    bc1 = init(ks[8], (1, hidden))
    wc2 = init(ks[9], (hidden, 1))
    bc2 = init(ks[10], (1, 1))
    return (w1, b1, wm, bm, ws, bs, wc1s, wc1a, bc1, wc2, bc2)


def pack_params(params, mxu_dtype=jnp.float32):
    """Pre-fuse / pre-transpose weights for the feature-major kernel layout.

    mxu_dtype=jnp.bfloat16 enables the fast MXU operand path on v6e/v7x; biases,
    wc2 and bc2 stay f32 (used on the VPU side only).
    """
    (w1, b1, wm, bm, ws, bs, wc1s, wc1a, bc1, wc2, bc2) = params
    wt_trunk = jnp.concatenate([w1.T, wc1s.T], axis=0).astype(mxu_dtype)   # (2H, S)
    wt_heads = jnp.concatenate([wm.T, ws.T], axis=0).astype(mxu_dtype)     # (2A, H)
    wt_c1a = wc1a.T.astype(mxu_dtype)                                      # (H, A)
    vec = jnp.concatenate([b1.T, bc1.T, bm.T, bs.T, wc2, bc2],
                          axis=0).astype(jnp.float32)                      # (3H+2A+1, 1)
    return wt_trunk, wt_heads, wt_c1a, vec


def reference(state, eps, params):
    (w1, b1, wm, bm, ws, bs, wc1s, wc1a, bc1, wc2, bc2) = params
    h = jnp.tanh(state @ w1 + b1)
    mean = h @ wm + bm
    std = jnp.exp(h @ ws + bs)
    action = ACTION_SCALE * jnp.clip(mean + std * eps, -1.0, 1.0)
    hc = jnp.maximum(state @ wc1s + action @ wc1a + bc1, 0.0)
    q = hc @ wc2 + bc2
    return -q


if __name__ == "__main__":
    key = jax.random.PRNGKey(0)
    k_state, k_eps, k_params = jax.random.split(key, 3)

    # batch, state_dim, action_dim, hidden; batch sized to exercise the grid (2 tiles).
    B, S, A, H = 512, 16, 8, 64
    TILE_B = 256

    state = jax.random.normal(k_state, (B, S), dtype=jnp.float32)
    eps = jax.random.normal(k_eps, (B, A), dtype=jnp.float32)   # rsample noise
    params = make_params(k_params, S, A, H)
    ref = reference(state, eps, params)

    # f32 MXU operands (v5e-friendly path): tight check against the reference.
    loss_f32 = jax.block_until_ready(
        pathwise_loss(state, eps, pack_params(params, jnp.float32), tile_b=TILE_B))
    assert loss_f32.shape == (B, 1)
    assert jnp.allclose(loss_f32, ref, atol=1e-4, rtol=1e-4), (loss_f32[:4], ref[:4])

    # bf16 MXU operands (v6e/v7x throughput path): f32 accumulation + f32 elementwise,
    # so only a small reduced-precision deviation is expected.
    loss_bf16 = jax.block_until_ready(
        pathwise_loss(state, eps, pack_params(params, jnp.bfloat16), tile_b=TILE_B))
    assert loss_bf16.shape == (B, 1)
    assert jnp.allclose(loss_bf16, ref, atol=5e-2, rtol=5e-2), (loss_bf16[:4], ref[:4])

    print("KERNEL_OK")
</pallas_src>

<mosaic_0001>
module attributes {stable_mosaic.version = 11 : i64} {
  func.func @pathwise_loss_kernel(%arg0: i32, %arg1: memref<16x256xf32, #tpu.memory_space<vmem>>, %arg2: memref<8x256xf32, #tpu.memory_space<vmem>>, %arg3: memref<128x16xf32, #tpu.memory_space<vmem>>, %arg4: memref<16x64xf32, #tpu.memory_space<vmem>>, %arg5: memref<64x8xf32, #tpu.memory_space<vmem>>, %arg6: memref<209x1xf32, #tpu.memory_space<vmem>>, %arg7: memref<1x256xf32, #tpu.memory_space<vmem>>) attributes {dimension_semantics = [#tpu.dimension_semantics<parallel>], iteration_bounds = array<i64: 2>, scalar_prefetch = 0 : i64, scratch_operands = 0 : i64, tpu.core_type = #tpu.core_type<tc>, window_params = [{transform_indices = @transform_0, window_bounds = array<i64: 16, 256>}, {transform_indices = @transform_1, window_bounds = array<i64: 8, 256>}, {pipeline_mode = #tpu.pipeline_mode<synchronous>, transform_indices = @transform_2, window_bounds = array<i64: 128, 16>}, {pipeline_mode = #tpu.pipeline_mode<synchronous>, transform_indices = @transform_3, window_bounds = array<i64: 16, 64>}, {pipeline_mode = #tpu.pipeline_mode<synchronous>, transform_indices = @transform_4, window_bounds = array<i64: 64, 8>}, {pipeline_mode = #tpu.pipeline_mode<synchronous>, transform_indices = @transform_5, window_bounds = array<i64: 209, 1>}, {transform_indices = @transform_6, window_bounds = array<i64: 1, 256>}]} {
    %c0 = arith.constant 0 : index
    %c0_0 = arith.constant 0 : index
    %0 = vector.load %arg1[%c0, %c0_0] : memref<16x256xf32, #tpu.memory_space<vmem>>, vector<16x256xf32>
    %c0_1 = arith.constant 0 : index
    %c0_2 = arith.constant 0 : index
    %1 = vector.load %arg2[%c0_1, %c0_2] : memref<8x256xf32, #tpu.memory_space<vmem>>, vector<8x256xf32>
    %c0_3 = arith.constant 0 : index
    %c0_4 = arith.constant 0 : index
    %2 = vector.load %arg6[%c0_3, %c0_4] : memref<209x1xf32, #tpu.memory_space<vmem>>, vector<64x1xf32>
    %c64 = arith.constant 64 : index
    %c0_5 = arith.constant 0 : index
    %3 = vector.load %arg6[%c64, %c0_5] : memref<209x1xf32, #tpu.memory_space<vmem>>, vector<64x1xf32>
    %c128 = arith.constant 128 : index
    %c0_6 = arith.constant 0 : index
    %4 = vector.load %arg6[%c128, %c0_6] : memref<209x1xf32, #tpu.memory_space<vmem>>, vector<16x1xf32>
    %c144 = arith.constant 144 : index
    %c0_7 = arith.constant 0 : index
    %5 = vector.load %arg6[%c144, %c0_7] : memref<209x1xf32, #tpu.memory_space<vmem>>, vector<64x1xf32>
    %c208 = arith.constant 208 : index
    %c0_8 = arith.constant 0 : index
    %6 = vector.load %arg6[%c208, %c0_8] : memref<209x1xf32, #tpu.memory_space<vmem>>, vector<1x1xf32>
    %c0_9 = arith.constant 0 : index
    %c0_10 = arith.constant 0 : index
    %7 = vector.load %arg3[%c0_9, %c0_10] : memref<128x16xf32, #tpu.memory_space<vmem>>, vector<128x16xf32>
    %cst = arith.constant dense<0.000000e+00> : vector<128x256xf32>
    %8 = tpu.matmul %7, %0, %cst {dimension_numbers = #tpu.dot_dimension_numbers<[1], [0], [0], [1], [0, 0, 1, 1], [], []>} : vector<128x16xf32>, vector<16x256xf32>, vector<128x256xf32> -> vector<128x256xf32>
    %9 = vector.extract_strided_slice %8 {offsets = [0, 0], sizes = [64, 256], strides = [1, 1]} : vector<128x256xf32> to vector<64x256xf32>
    %10 = vector.broadcast %2 : vector<64x1xf32> to vector<64x256xf32>
    %11 = arith.addf %9, %10 : vector<64x256xf32>
    %12 = math.tanh %11 : vector<64x256xf32>
    %13 = vector.extract_strided_slice %8 {offsets = [64, 0], sizes = [64, 256], strides = [1, 1]} : vector<128x256xf32> to vector<64x256xf32>
    %c0_11 = arith.constant 0 : index
    %c0_12 = arith.constant 0 : index
    %14 = vector.load %arg4[%c0_11, %c0_12] : memref<16x64xf32, #tpu.memory_space<vmem>>, vector<16x64xf32>
    %cst_13 = arith.constant dense<0.000000e+00> : vector<16x256xf32>
    %15 = tpu.matmul %14, %12, %cst_13 {dimension_numbers = #tpu.dot_dimension_numbers<[1], [0], [0], [1], [0, 0, 1, 1], [], []>} : vector<16x64xf32>, vector<64x256xf32>, vector<16x256xf32> -> vector<16x256xf32>
    %16 = vector.broadcast %4 : vector<16x1xf32> to vector<16x256xf32>
    %17 = arith.addf %15, %16 : vector<16x256xf32>
    %18 = vector.extract_strided_slice %17 {offsets = [0, 0], sizes = [8, 256], strides = [1, 1]} : vector<16x256xf32> to vector<8x256xf32>
    %19 = vector.extract_strided_slice %17 {offsets = [8, 0], sizes = [8, 256], strides = [1, 1]} : vector<16x256xf32> to vector<8x256xf32>
    %20 = math.exp %19 : vector<8x256xf32>
    %21 = arith.mulf %20, %1 : vector<8x256xf32>
    %22 = arith.addf %18, %21 : vector<8x256xf32>
    %cst_14 = arith.constant -1.000000e+00 : f32
    %cst_15 = arith.constant 1.000000e+00 : f32
    %23 = vector.broadcast %cst_14 : f32 to vector<8x256xf32>
    %24 = arith.maximumf %23, %22 : vector<8x256xf32>
    %25 = vector.broadcast %cst_15 : f32 to vector<8x256xf32>
    %26 = arith.minimumf %25, %24 : vector<8x256xf32>
    %cst_16 = arith.constant 1.000000e+00 : f32
    %27 = vector.broadcast %cst_16 : f32 to vector<8x256xf32>
    %28 = arith.mulf %27, %26 : vector<8x256xf32>
    %c0_17 = arith.constant 0 : index
    %c0_18 = arith.constant 0 : index
    %29 = vector.load %arg5[%c0_17, %c0_18] : memref<64x8xf32, #tpu.memory_space<vmem>>, vector<64x8xf32>
    %cst_19 = arith.constant dense<0.000000e+00> : vector<64x256xf32>
    %30 = tpu.matmul %29, %28, %cst_19 {dimension_numbers = #tpu.dot_dimension_numbers<[1], [0], [0], [1], [0, 0, 1, 1], [], []>} : vector<64x8xf32>, vector<8x256xf32>, vector<64x256xf32> -> vector<64x256xf32>
    %31 = arith.addf %13, %30 : vector<64x256xf32>
    %32 = vector.broadcast %3 : vector<64x1xf32> to vector<64x256xf32>
    %33 = arith.addf %31, %32 : vector<64x256xf32>
    %cst_20 = arith.constant 0.000000e+00 : f32
    %34 = vector.broadcast %cst_20 : f32 to vector<64x256xf32>
    %35 = arith.maximumf %33, %34 : vector<64x256xf32>
    %36 = vector.broadcast %5 : vector<64x1xf32> to vector<64x256xf32>
    %37 = arith.mulf %35, %36 : vector<64x256xf32>
    %cst_21 = arith.constant dense<0.000000e+00> : vector<256xf32>
    %38 = vector.multi_reduction <add>, %37, %cst_21 [0] : vector<64x256xf32> to vector<256xf32>
    %39 = vector.shape_cast %38 : vector<256xf32> to vector<1x256xf32>
    %40 = vector.broadcast %6 : vector<1x1xf32> to vector<1x256xf32>
    %41 = arith.addf %39, %40 : vector<1x256xf32>
    %cst_22 = arith.constant 0.000000e+00 : f32
    %42 = vector.broadcast %cst_22 : f32 to vector<1x256xf32>
    %43 = arith.subf %42, %41 : vector<1x256xf32>
    %c0_23 = arith.constant 0 : index
    %c0_24 = arith.constant 0 : index
    %44 = vector.load %arg7[%c0_23, %c0_24] : memref<1x256xf32, #tpu.memory_space<vmem>>, vector<1x256xf32>
    tpu.vector_store %arg7[%c0_23, %c0_24], %43 {strides = array<i32>} : memref<1x256xf32, #tpu.memory_space<vmem>>, vector<1x256xf32>,
    return
  }
  func.func @transform_0(%arg0: i32) -> (i32, i32) {
    %c0_i32 = arith.constant 0 : i32
    %c0_i32_0 = arith.constant 0 : i32
    return %c0_i32, %arg0 : i32, i32
  }
  func.func @transform_1(%arg0: i32) -> (i32, i32) {
    %c0_i32 = arith.constant 0 : i32
    %c0_i32_0 = arith.constant 0 : i32
    return %c0_i32, %arg0 : i32, i32
  }
  func.func @transform_2(%arg0: i32) -> (i32, i32) {
    %c0_i32 = arith.constant 0 : i32
    %c0_i32_0 = arith.constant 0 : i32
    %c0_i32_1 = arith.constant 0 : i32
    return %c0_i32, %c0_i32_0 : i32, i32
  }
  func.func @transform_3(%arg0: i32) -> (i32, i32) {
    %c0_i32 = arith.constant 0 : i32
    %c0_i32_0 = arith.constant 0 : i32
    %c0_i32_1 = arith.constant 0 : i32
    return %c0_i32, %c0_i32_0 : i32, i32
  }
  func.func @transform_4(%arg0: i32) -> (i32, i32) {
    %c0_i32 = arith.constant 0 : i32
    %c0_i32_0 = arith.constant 0 : i32
    %c0_i32_1 = arith.constant 0 : i32
    return %c0_i32, %c0_i32_0 : i32, i32
  }
  func.func @transform_5(%arg0: i32) -> (i32, i32) {
    %c0_i32 = arith.constant 0 : i32
    %c0_i32_0 = arith.constant 0 : i32
    %c0_i32_1 = arith.constant 0 : i32
    return %c0_i32, %c0_i32_0 : i32, i32
  }
  func.func @transform_6(%arg0: i32) -> (i32, i32) {
    %c0_i32 = arith.constant 0 : i32
    %c0_i32_0 = arith.constant 0 : i32
    return %c0_i32, %arg0 : i32, i32
  }
}

</mosaic_0001>

<llo_original>
// kernel: tpu_custom_call.1
$region0: #{tpu_custom_call.1}
  #allocation0 [shape = 'u32[]', space=smem, size = 0x4, offset = 0x4, fixed_abs, tag = 'smem constant byte address 0x4 - core index']
  #allocation1 [shape = 'u32[72,128]{1,0:T(1,128)}', space=vmem, size = 0x9000, scoped, tag = 'internal scratch']
  %s0 = inlined_call_operand.vmem [shape: f32[16,512], index: 0, kind: input, shape index: {}]
  %s1 = inlined_call_operand.vmem [shape: f32[8,512], index: 1, kind: input, shape index: {}]
  %s2 = inlined_call_operand.vmem [shape: f32[128,16], index: 2, kind: input, shape index: {}]
  %s3 = inlined_call_operand.vmem [shape: f32[16,64], index: 3, kind: input, shape index: {}]
  %s4 = inlined_call_operand.vmem [shape: f32[64,8], index: 4, kind: input, shape index: {}]
  %s5 = inlined_call_operand.vmem [shape: f32[209,1], index: 5, kind: input, shape index: {}]
  %s6 = inlined_call_operand.hbm [shape: f32[1,512], index: 6, kind: output, shape index: {}]
  %s7 = sld [smem:[#allocation0]]
  $region80: #{tpu_custom_call.1} parent=0
    _
  %s9 = ssub.s32 1, %s7
  %s10 = scalar_select 0, %s9, %s7
  $region1: #{tpu_custom_call.1} parent=0
    #allocation2 [shape = 'u8[32768]{0}', space=vmem, size = 0x8000, scoped, tag = 'input window, operand 0']
    #allocation3 [shape = 'u8[2048]{0}', space=vmem, size = 0x800, scoped, tag = 'output window, operand 0']
    #allocation4 [shape = 's32[2]{0}', space=sflag, size = 0x8, scoped, tag = 'scoped memory for tpu_custom_call.1']
    %11 = vsyncpa [#allocation4], 0
    %s12 = scalar_lea.sflag [#allocation4], 1
    %13 = vsyncpa %s12, 0
    loop: start=0, step=1, limit=4
    $region2: #{tpu_custom_call.1} parent=1 // loop_pre_header
      _
    $region3: #{tpu_custom_call.1} parent=1 // loop_header
      %s15 = sphi 0, %s19
      %p16 = scmp.ge.s32.totalorder %s15, 4
      %s25 = sphi 0, %s27
      %s28 = sphi 0, %s25
      %s29 = sphi 0, %s28
      %s45 = sphi 0, %s29
      %s51 = sphi 0, %s53
      %s54 = sphi 0, %s51
      %s55 = sphi 0, %s54
      %s71 = sphi 0, %s55
      %s75 = sphi 0, %s75
      %s77 = sphi 0, %s75
      %s78 = sphi 0, %s77
      %s92 = sphi 0, %s78
      %s96 = sphi 0, %s96
      %s98 = sphi 0, %s96
      %s99 = sphi 0, %s98
      %s113 = sphi 0, %s99
      %s117 = sphi 0, %s117
      %s119 = sphi 0, %s117
      %s120 = sphi 0, %s119
      %s134 = sphi 0, %s120
      %s138 = sphi 0, %s138
      %s140 = sphi 0, %s138
      %s141 = sphi 0, %s140
      %s155 = sphi 0, %s141
      %s161 = sphi 0, %s163
      %s164 = sphi 0, %s161
      %s165 = sphi 0, %s164
      %s181 = sphi 0, %s165
    $region4: #{tpu_custom_call.1} parent=1 // loop_header_branch
      %18 = sbr.rel (%p16) target = $region8
    $region5: #{tpu_custom_call.1} parent=1 // loop_body
      %s20 = ssub.s32 %s15, 1
      %s21 = ssub.s32 %s15, 2
      %s22 = sadd.s32 %s15, 1
      %s23 = ssub.s32 %s15, %s22
      %p24 = scmp.eq.s32.totalorder %s23, 0
      %s26 = sadd.s32 %s25, 1
      %s27 = scalar_select %p24, %s25, %s26
      %p30 = pneg %p24
      %p31 = scmp.eq.s32.totalorder %s15, 1
      %p32 = por %p30, %p31
      %p33 = scmp.ne.s32.totalorder %s25, %s28
      %p34 = scmp.eq.s32.totalorder %s15, 0
      %p35 = por %p33, %p34
      %p36 = scmp.ne.s32.totalorder %s25, %s28
      %p37 = scmp.eq.s32.totalorder %s20, 1
      %p38 = por %p36, %p37
      %p39 = scmp.ne.s32.totalorder %s28, %s29
      %p40 = scmp.eq.s32.totalorder %s20, 0
      %p41 = por %p39, %p40
      %p42 = scmp.ne.s32.totalorder %s28, %s29
      %p43 = scmp.eq.s32.totalorder %s21, 1
      %p44 = por %p42, %p43
      %p46 = scmp.ne.s32.totalorder %s29, %s45
      %p47 = scmp.eq.s32.totalorder %s21, 0
      %p48 = por %p46, %p47
      %s49 = ssub.s32 %s15, %s22
      %p50 = scmp.eq.s32.totalorder %s49, 0
      %s52 = sadd.s32 %s51, 1
      %s53 = scalar_select %p50, %s51, %s52
      %p56 = pneg %p50
      %p57 = scmp.eq.s32.totalorder %s15, 1
      %p58 = por %p56, %p57
      %p59 = scmp.ne.s32.totalorder %s51, %s54
      %p60 = scmp.eq.s32.totalorder %s15, 0
      %p61 = por %p59, %p60
      %p62 = scmp.ne.s32.totalorder %s51, %s54
      %p63 = scmp.eq.s32.totalorder %s20, 1
      %p64 = por %p62, %p63
      %p65 = scmp.ne.s32.totalorder %s54, %s55
      %p66 = scmp.eq.s32.totalorder %s20, 0
      %p67 = por %p65, %p66
      %p68 = scmp.ne.s32.totalorder %s54, %s55
      %p69 = scmp.eq.s32.totalorder %s21, 1
      %p70 = por %p68, %p69
      %p72 = scmp.ne.s32.totalorder %s55, %s71
      %p73 = scmp.eq.s32.totalorder %s21, 0
      %p74 = por %p72, %p73
      %s76 = sadd.s32 %s75, 1
      %p79 = scmp.eq.s32.totalorder %s15, 1
      %p80 = scmp.ne.s32.totalorder %s75, %s77
      %p81 = scmp.eq.s32.totalorder %s15, 0
      %p82 = por %p80, %p81
      %p83 = scmp.ne.s32.totalorder %s75, %s77
      %p84 = scmp.eq.s32.totalorder %s20, 1
      %p85 = por %p83, %p84
      %p86 = scmp.ne.s32.totalorder %s77, %s78
      %p87 = scmp.eq.s32.totalorder %s20, 0
      %p88 = por %p86, %p87
      %p89 = scmp.ne.s32.totalorder %s77, %s78
      %p90 = scmp.eq.s32.totalorder %s21, 1
      %p91 = por %p89, %p90
      %p93 = scmp.ne.s32.totalorder %s78, %s92
      %p94 = scmp.eq.s32.totalorder %s21, 0
      %p95 = por %p93, %p94
      %s97 = sadd.s32 %s96, 1
      %p100 = scmp.eq.s32.totalorder %s15, 1
      %p101 = scmp.ne.s32.totalorder %s96, %s98
      %p102 = scmp.eq.s32.totalorder %s15, 0
      %p103 = por %p101, %p102
      %p104 = scmp.ne.s32.totalorder %s96, %s98
      %p105 = scmp.eq.s32.totalorder %s20, 1
      %p106 = por %p104, %p105
      %p107 = scmp.ne.s32.totalorder %s98, %s99
      %p108 = scmp.eq.s32.totalorder %s20, 0
      %p109 = por %p107, %p108
      %p110 = scmp.ne.s32.totalorder %s98, %s99
      %p111 = scmp.eq.s32.totalorder %s21, 1
      %p112 = por %p110, %p111
      %p114 = scmp.ne.s32.totalorder %s99, %s113
      %p115 = scmp.eq.s32.totalorder %s21, 0
      %p116 = por %p114, %p115
      %s118 = sadd.s32 %s117, 1
      %p121 = scmp.eq.s32.totalorder %s15, 1
      %p122 = scmp.ne.s32.totalorder %s117, %s119
      %p123 = scmp.eq.s32.totalorder %s15, 0
      %p124 = por %p122, %p123
      %p125 = scmp.ne.s32.totalorder %s117, %s119
      %p126 = scmp.eq.s32.totalorder %s20, 1
      %p127 = por %p125, %p126
      %p128 = scmp.ne.s32.totalorder %s119, %s120
      %p129 = scmp.eq.s32.totalorder %s20, 0
      %p130 = por %p128, %p129
      %p131 = scmp.ne.s32.totalorder %s119, %s120
      %p132 = scmp.eq.s32.totalorder %s21, 1
      %p133 = por %p131, %p132
      %p135 = scmp.ne.s32.totalorder %s120, %s134
      %p136 = scmp.eq.s32.totalorder %s21, 0
      %p137 = por %p135, %p136
      %s139 = sadd.s32 %s138, 1
      %p142 = scmp.eq.s32.totalorder %s15, 1
      %p143 = scmp.ne.s32.totalorder %s138, %s140
      %p144 = scmp.eq.s32.totalorder %s15, 0
      %p145 = por %p143, %p144
      %p146 = scmp.ne.s32.totalorder %s138, %s140
      %p147 = scmp.eq.s32.totalorder %s20, 1
      %p148 = por %p146, %p147
      %p149 = scmp.ne.s32.totalorder %s140, %s141
      %p150 = scmp.eq.s32.totalorder %s20, 0
      %p151 = por %p149, %p150
      %p152 = scmp.ne.s32.totalorder %s140, %s141
      %p153 = scmp.eq.s32.totalorder %s21, 1
      %p154 = por %p152, %p153
      %p156 = scmp.ne.s32.totalorder %s141, %s155
      %p157 = scmp.eq.s32.totalorder %s21, 0
      %p158 = por %p156, %p157
      %s159 = ssub.s32 %s15, %s22
      %p160 = scmp.eq.s32.totalorder %s159, 0
      %s162 = sadd.s32 %s161, 1
      %s163 = scalar_select %p160, %s161, %s162
      %p166 = pneg %p160
      %p167 = scmp.eq.s32.totalorder %s15, 1
      %p168 = por %p166, %p167
      %p169 = scmp.ne.s32.totalorder %s161, %s164
      %p170 = scmp.eq.s32.totalorder %s15, 0
      %p171 = por %p169, %p170
      %p172 = scmp.ne.s32.totalorder %s161, %s164
      %p173 = scmp.eq.s32.totalorder %s20, 1
      %p174 = por %p172, %p173
      %p175 = scmp.ne.s32.totalorder %s164, %s165
      %p176 = scmp.eq.s32.totalorder %s20, 0
      %p177 = por %p175, %p176
      %p178 = scmp.ne.s32.totalorder %s164, %s165
      %p179 = scmp.eq.s32.totalorder %s21, 1
      %p180 = por %p178, %p179
      %p182 = scmp.ne.s32.totalorder %s165, %s181
      %p183 = scmp.eq.s32.totalorder %s21, 0
      %p184 = por %p182, %p183
      %p185 = scmp.le.s32.totalorder 1, %s15
      %p186 = scmp.lt.s32.totalorder %s15, 3
      %p187 = pnand %p185, %p186
      %p188 = pneg %p187
      // Predicated region
      $region9: #{tpu_custom_call.1} parent=5 // pred_check
        _
      $region10: #{tpu_custom_call.1} parent=5 // pred_check_branch
        %190 = sbr.rel (%p187) target = $region12
      $region11: #{tpu_custom_call.1} parent=5 // pred_region
        %s191 = ssub.s32 %s15, 1
        // Predicated region
        $region13: #{tpu_custom_call.1} parent=11 // pred_check
          %p192 = pneg %p88
        $region14: #{tpu_custom_call.1} parent=11 // pred_check_branch
          %194 = sbr.rel (%p192) target = $region16
        $region15: #{tpu_custom_call.1} parent=11 // pred_region
          _
        $region16: #{tpu_custom_call.1} parent=11 // pred_fallthru
          _
        // Predicated region
        $region17: #{tpu_custom_call.1} parent=11 // pred_check
          %p195 = pneg %p109
        $region18: #{tpu_custom_call.1} parent=11 // pred_check_branch
          %197 = sbr.rel (%p195) target = $region20
        $region19: #{tpu_custom_call.1} parent=11 // pred_region
          _
        $region20: #{tpu_custom_call.1} parent=11 // pred_fallthru
          _
        // Predicated region
        $region21: #{tpu_custom_call.1} parent=11 // pred_check
          %p198 = pneg %p130
        $region22: #{tpu_custom_call.1} parent=11 // pred_check_branch
          %200 = sbr.rel (%p198) target = $region24
        $region23: #{tpu_custom_call.1} parent=11 // pred_region
          _
        $region24: #{tpu_custom_call.1} parent=11 // pred_fallthru
          _
        // Predicated region
        $region25: #{tpu_custom_call.1} parent=11 // pred_check
          %p201 = pneg %p151
        $region26: #{tpu_custom_call.1} parent=11 // pred_check_branch
          %203 = sbr.rel (%p201) target = $region28
        $region27: #{tpu_custom_call.1} parent=11 // pred_region
          _
        $region28: #{tpu_custom_call.1} parent=11 // pred_fallthru
          _
      $region12: #{tpu_custom_call.1} parent=5 // pred_fallthru
        _
      %p204 = scmp.lt.s32.totalorder %s15, 2
      // Predicated region
      $region29: #{tpu_custom_call.1} parent=5 // pred_check
        %p205 = pneg %p204
      $region30: #{tpu_custom_call.1} parent=5 // pred_check_branch
        %207 = sbr.rel (%p205) target = $region32
      $region31: #{tpu_custom_call.1} parent=5 // pred_region
        // Predicated region
        $region33: #{tpu_custom_call.1} parent=31 // pred_check
          %p208 = pneg %p35
        $region34: #{tpu_custom_call.1} parent=31 // pred_check_branch
          %210 = sbr.rel (%p208) target = $region36
        $region35: #{tpu_custom_call.1} parent=31 // pred_region
          %s211 = sand.u32 %s25, 1
          %s212 = sand.u32 %s25, 1
          %s213 = smul.addr %s212, 32
          %s214 = scalar_lea.vmem [#allocation2], %s213
          %s215 = smul.u32 2, %s15
          %s216 = smul.addr %s215, 8
          %s217 = scalar_lea.vmem %s0, %s216
          // Predicated region
          $region37: #{tpu_custom_call.1} parent=35 // pred_check
            _
          $region38: #{tpu_custom_call.1} parent=35 // pred_check_branch
            %219 = sbr.rel (0) target = $region40
          $region39: #{tpu_custom_call.1} parent=35 // pred_region
            // Predicated region
            $region41: #{tpu_custom_call.1} parent=39 // pred_check
              _
            $region42: #{tpu_custom_call.1} parent=39 // pred_check_branch
              %221 = sbr.rel (0) target = $region44
            $region43: #{tpu_custom_call.1} parent=39 // pred_region
              loop: start=0, step=1, limit=1
              $region45: #{tpu_custom_call.1} parent=43 // loop_pre_header
                _
              $region46: #{tpu_custom_call.1} parent=43 // loop_header
                %s223 = sphi 0, %s227
                %p224 = scmp.ge.s32.totalorder %s223, 1
                %s228 = sphi %s217, %s217
                %s229 = sphi %s214, %s214
              $region47: #{tpu_custom_call.1} parent=43 // loop_header_branch
                %226 = sbr.rel (%p224) target = $region51
              $region48: #{tpu_custom_call.1} parent=43 // loop_body
                %v230 = vld [vmem:[%s228] sm:$0xff]
                %231 = vst [vmem:[%s229] sm:$0xff] %v230
                %v232 = vld [vmem:[%s228 + $0x8] sm:$0xff]
                %233 = vst [vmem:[%s229 + $0x8] sm:$0xff] %v232
                %v234 = vld [vmem:[%s228 + $0x20] sm:$0xff]
                %235 = vst [vmem:[%s229 + $0x10] sm:$0xff] %v234
                %v236 = vld [vmem:[%s228 + $0x28] sm:$0xff]
                %237 = vst [vmem:[%s229 + $0x18] sm:$0xff] %v236
              $region49: #{tpu_custom_call.1} parent=43 // loop_footer
                %s227 = sadd.s32 1, %s223
              $region50: #{tpu_custom_call.1} parent=43 // loop_footer_branch
                %222 = sbr.rel target = $region46
              $region51: #{tpu_custom_call.1} parent=43 // loop_exit
                _
            $region44: #{tpu_custom_call.1} parent=39 // pred_fallthru
              _
            // Predicated region
            $region52: #{tpu_custom_call.1} parent=39 // pred_check
              _
            $region53: #{tpu_custom_call.1} parent=39 // pred_check_branch
              %239 = sbr.rel target = $region55
            $region54: #{tpu_custom_call.1} parent=39 // pred_region
              _
            $region55: #{tpu_custom_call.1} parent=39 // pred_fallthru
              _
          $region40: #{tpu_custom_call.1} parent=35 // pred_fallthru
            _
          %240 = vnop
        $region36: #{tpu_custom_call.1} parent=31 // pred_fallthru
          _
        // Predicated region
        $region56: #{tpu_custom_call.1} parent=31 // pred_check
          %p241 = pneg %p61
        $region57: #{tpu_custom_call.1} parent=31 // pred_check_branch
          %243 = sbr.rel (%p241) target = $region59
        $region58: #{tpu_custom_call.1} parent=31 // pred_region
          %s244 = smul.u32 2, %s15
          %p245 = scmp.lt.s32.totalorder %s244, 3
          %s246 = scalar_select %p245, %s244, 3
          %s247 = smul.addr %s246, 8
          %s248 = scalar_lea.vmem %s1, %s247
          %s249 = smul.u32 2, %s15
        $region59: #{tpu_custom_call.1} parent=31 // pred_fallthru
          _
      $region32: #{tpu_custom_call.1} parent=5 // pred_fallthru
        _
      %p250 = scmp.le.s32.totalorder 1, %s15
      %p251 = scmp.lt.s32.totalorder %s15, 3
      %p252 = pnand %p250, %p251
      %p253 = pneg %p252
      // Predicated region
      $region60: #{tpu_custom_call.1} parent=5 // pred_check
        _
      $region61: #{tpu_custom_call.1} parent=5 // pred_check_branch
        %255 = sbr.rel (%p252) target = $region63
      $region62: #{tpu_custom_call.1} parent=5 // pred_region
        %s256 = ssub.s32 %s15, 1
        %s257 = sand.u32 %s28, 1
        %s258 = sand.u32 %s28, 1
        %s259 = smul.addr %s258, 32
        %s260 = scalar_lea.vmem [#allocation2], %s259
        // Predicated region
        $region64: #{tpu_custom_call.1} parent=62 // pred_check
          %p261 = pneg %p41
        $region65: #{tpu_custom_call.1} parent=62 // pred_check_branch
          %263 = sbr.rel (%p261) target = $region67
        $region66: #{tpu_custom_call.1} parent=62 // pred_region
          _
        $region67: #{tpu_custom_call.1} parent=62 // pred_fallthru
          _
        %s264 = sand.u32 %s28, 1
        %s265 = sand.u32 %s28, 1
        %s266 = smul.addr %s265, 32
        %s267 = scalar_lea.vmem [#allocation2], %s266
        %p268 = pneg %p41
        %p269 = pneg %p38
        %s270 = smul.u32 2, %s20
        %p271 = scmp.lt.s32.totalorder %s270, 3
        %s272 = scalar_select %p271, %s270, 3
        %s273 = smul.addr %s272, 8
        %s274 = scalar_lea.vmem %s1, %s273
        %p275 = pneg %p67
        %p276 = pneg %p64
        %p277 = pneg %p88
        %p278 = pneg %p85
        %p279 = pneg %p109
        %p280 = pneg %p106
        %p281 = pneg %p130
        %p282 = pneg %p127
        %p283 = pneg %p151
        %p284 = pneg %p148
        %p285 = pneg %p177
        %p286 = pneg %p174
        %s287 = sand.u32 %s164, 1
        %s288 = scalar_lea.sflag [#allocation4], %s287
        %s289 = sand.u32 %s164, 1
        %s290 = smul.addr %s289, 2
        %s291 = scalar_lea.vmem [#allocation3], %s290
        %s292 = smul.u32 2, %s20
        %s293 = smul.u32 2, %s20
        %p294 = scmp.lt.s32.totalorder %s293, 3
        %s295 = scalar_select %p294, %s293, 3
        %s296 = smul.addr %s295, 8
        %s297 = scalar_lea.vmem %s1, %s296
        %s298 = smul.u32 2, %s20
        %s299 = smul.u32 2, %s20
        %v300 = vld [vmem:[%s260] sm:$0xff]
        %v301 = vld [vmem:[%s260 + $0x8] sm:$0xff]
        %v302 = vld [vmem:[%s260 + $0x10] sm:$0xff]
        %v303 = vld [vmem:[%s260 + $0x18] sm:$0xff]
        %v304 = vld [vmem:[%s297] sm:$0xff]
        %v305 = vld [vmem:[%s297 + $0x8] sm:$0xff]
        %v306 = vld [vmem:[%s5] sm:$0xff]
        %v307 = vld [vmem:[%s5 + $0x8] sm:$0xff]
        %v308 = vld [vmem:[%s5 + $0x10] sm:$0xff]
        %v309 = vld [vmem:[%s5 + $0x18] sm:$0xff]
        %v310 = vld [vmem:[%s5 + $0x20] sm:$0xff]
        %v311 = vld [vmem:[%s5 + $0x28] sm:$0xff]
        %v312 = vld [vmem:[%s5 + $0x30] sm:$0xff]
        %v313 = vld [vmem:[%s5 + $0x38] sm:$0xff]
        %v314 = vld [vmem:[%s5 + $0x40] sm:$0xff]
        %v315 = vld [vmem:[%s5 + $0x48] sm:$0xff]
        %v316 = vld [vmem:[%s5 + $0x50] sm:$0xff]
        %v317 = vld [vmem:[%s5 + $0x58] sm:$0xff]
        %v318 = vld [vmem:[%s5 + $0x60] sm:$0xff]
        %v319 = vld [vmem:[%s5 + $0x68] sm:$0xff]
        %v320 = vld [vmem:[%s5 + $0x70] sm:$0xff]
        %v321 = vld [vmem:[%s5 + $0x78] sm:$0xff]
        %v322 = vld [vmem:[%s5 + $0x80] sm:$0xff]
        %v323 = vld [vmem:[%s5 + $0x88] sm:$0xff]
        %v324 = vld [vmem:[%s5 + $0x90] sm:$0xff]
        %v325 = vld [vmem:[%s5 + $0x98] sm:$0xff]
        %v326 = vld [vmem:[%s5 + $0xa0] sm:$0xff]
        %v327 = vld [vmem:[%s5 + $0xa8] sm:$0xff]
        %v328 = vld [vmem:[%s5 + $0xb0] sm:$0xff]
        %v329 = vld [vmem:[%s5 + $0xb8] sm:$0xff]
        %v330 = vld [vmem:[%s5 + $0xc0] sm:$0xff]
        %v331 = vld [vmem:[%s5 + $0xc8] sm:$0xff]
        %v332 = vld [vmem:[%s5 + $0xd0] sm:$0x1]
        %v333 = vld [vmem:[%s2] sm:$0xff]
        %v334 = vld [vmem:[%s2 + $0x8] sm:$0xff]
        %v335 = vld [vmem:[%s2 + $0x10] sm:$0xff]
        %v336 = vld [vmem:[%s2 + $0x18] sm:$0xff]
        %v337 = vld [vmem:[%s2 + $0x20] sm:$0xff]
        %v338 = vld [vmem:[%s2 + $0x28] sm:$0xff]
        %v339 = vld [vmem:[%s2 + $0x30] sm:$0xff]
        %v340 = vld [vmem:[%s2 + $0x38] sm:$0xff]
        %v341 = vld [vmem:[%s2 + $0x40] sm:$0xff]
        %v342 = vld [vmem:[%s2 + $0x48] sm:$0xff]
        %v343 = vld [vmem:[%s2 + $0x50] sm:$0xff]
        %v344 = vld [vmem:[%s2 + $0x58] sm:$0xff]
        %v345 = vld [vmem:[%s2 + $0x60] sm:$0xff]
        %v346 = vld [vmem:[%s2 + $0x68] sm:$0xff]
        %v347 = vld [vmem:[%s2 + $0x70] sm:$0xff]
        %v348 = vld [vmem:[%s2 + $0x78] sm:$0xff]
        %vm349 = vcmask 130048
        %v351 = vsel %vm349, %v333, 0
        %v354 = vsel %vm349, %v334, 0
        %v357 = vsel %vm349, %v335, 0
        %v360 = vsel %vm349, %v336, 0
        %v363 = vsel %vm349, %v337, 0
        %v366 = vsel %vm349, %v338, 0
        %v369 = vsel %vm349, %v339, 0
        %v372 = vsel %vm349, %v340, 0
        %v375 = vsel %vm349, %v341, 0
        %v378 = vsel %vm349, %v342, 0
        %v381 = vsel %vm349, %v343, 0
        %v384 = vsel %vm349, %v344, 0
        %v387 = vsel %vm349, %v345, 0
        %v390 = vsel %vm349, %v346, 0
        %v393 = vsel %vm349, %v347, 0
        %v396 = vsel %vm349, %v348, 0
        %398 = vmatpush.msra.mxu0 0.0
        %399 = vmatpush.msra.mxu0 0.0
        %400 = vmatpush.msra.mxu0 0.0
        %401 = vmatpush.msra.mxu0 0.0
        %402 = vmatpush.msra.mxu0 0.0
        %403 = vmatpush.msra.mxu0 0.0
        %404 = vmatpush.msra.mxu0 0.0
        %405 = vmatpush.msra.mxu0 0.0
        %406 = vmatpush.msra.mxu0 0.0
        %407 = vmatpush.msra.mxu0 0.0
        %408 = vmatpush.msra.mxu0 0.0
        %409 = vmatpush.msra.mxu0 0.0
        %410 = vmatpush.msra.mxu0 0.0
        %411 = vmatpush.msra.mxu0 0.0
        %412 = vmatpush.msra.mxu0 %v302
        %413 = vmatpush.msra.mxu0 %v300
        %414 = vmatmul.f32.gmra.mxu0 %v351
        %v415 = vpop.f32.mrf.mxu0
        %v416 = vadd.f32 0.0, %v415
        %417 = vmatmul.f32.gmra.mxu0 %v354
        %v418 = vpop.f32.mrf.mxu0
        %v419 = vadd.f32 0.0, %v418
        %420 = vmatmul.f32.gmra.mxu0 %v357
        %v421 = vpop.f32.mrf.mxu0
        %v422 = vadd.f32 0.0, %v421
        %423 = vmatmul.f32.gmra.mxu0 %v360
        %v424 = vpop.f32.mrf.mxu0
        %v425 = vadd.f32 0.0, %v424
        %426 = vmatmul.f32.gmra.mxu0 %v363
        %v427 = vpop.f32.mrf.mxu0
        %v428 = vadd.f32 0.0, %v427
        %429 = vmatmul.f32.gmra.mxu0 %v366
        %v430 = vpop.f32.mrf.mxu0
        %v431 = vadd.f32 0.0, %v430
        %432 = vmatmul.f32.gmra.mxu0 %v369
        %v433 = vpop.f32.mrf.mxu0
        %v434 = vadd.f32 0.0, %v433
        %435 = vmatmul.f32.gmra.mxu0 %v372
        %v436 = vpop.f32.mrf.mxu0
        %v437 = vadd.f32 0.0, %v436
        %438 = vmatmul.f32.gmra.mxu0 %v375
        %v439 = vpop.f32.mrf.mxu0
        %v440 = vadd.f32 0.0, %v439
        %441 = vmatmul.f32.gmra.mxu0 %v378
        %v442 = vpop.f32.mrf.mxu0
        %v443 = vadd.f32 0.0, %v442
        %444 = vmatmul.f32.gmra.mxu0 %v381
        %v445 = vpop.f32.mrf.mxu0
        %v446 = vadd.f32 0.0, %v445
        %447 = vmatmul.f32.gmra.mxu0 %v384
        %v448 = vpop.f32.mrf.mxu0
        %v449 = vadd.f32 0.0, %v448
        %450 = vmatmul.f32.gmra.mxu0 %v387
        %v451 = vpop.f32.mrf.mxu0
        %v452 = vadd.f32 0.0, %v451
        %453 = vmatmul.f32.gmra.mxu0 %v390
        %v454 = vpop.f32.mrf.mxu0
        %v455 = vadd.f32 0.0, %v454
        %456 = vmatmul.f32.gmra.mxu0 %v393
        %v457 = vpop.f32.mrf.mxu0
        %v458 = vadd.f32 0.0, %v457
        %459 = vmatmul.f32.gmra.mxu0 %v396
        %v460 = vpop.f32.mrf.mxu0
        %v461 = vadd.f32 0.0, %v460
        %462 = vdwg.mxu0
        %463 = vmatpush.msra.mxu0 0.0
        %464 = vmatpush.msra.mxu0 0.0
        %465 = vmatpush.msra.mxu0 0.0
        %466 = vmatpush.msra.mxu0 0.0
        %467 = vmatpush.msra.mxu0 0.0
        %468 = vmatpush.msra.mxu0 0.0
        %469 = vmatpush.msra.mxu0 0.0
        %470 = vmatpush.msra.mxu0 0.0
        %471 = vmatpush.msra.mxu0 0.0
        %472 = vmatpush.msra.mxu0 0.0
        %473 = vmatpush.msra.mxu0 0.0
        %474 = vmatpush.msra.mxu0 0.0
        %475 = vmatpush.msra.mxu0 0.0
        %476 = vmatpush.msra.mxu0 0.0
        %477 = vmatpush.msra.mxu0 %v303
        %478 = vmatpush.msra.mxu0 %v301
        %479 = vmatmul.f32.gmra.mxu0 %v351
        %v480 = vpop.f32.mrf.mxu0
        %v481 = vadd.f32 0.0, %v480
        %482 = vmatmul.f32.gmra.mxu0 %v354
        %v483 = vpop.f32.mrf.mxu0
        %v484 = vadd.f32 0.0, %v483
        %485 = vmatmul.f32.gmra.mxu0 %v357
        %v486 = vpop.f32.mrf.mxu0
        %v487 = vadd.f32 0.0, %v486
        %488 = vmatmul.f32.gmra.mxu0 %v360
        %v489 = vpop.f32.mrf.mxu0
        %v490 = vadd.f32 0.0, %v489
        %491 = vmatmul.f32.gmra.mxu0 %v363
        %v492 = vpop.f32.mrf.mxu0
        %v493 = vadd.f32 0.0, %v492
        %494 = vmatmul.f32.gmra.mxu0 %v366
        %v495 = vpop.f32.mrf.mxu0
        %v496 = vadd.f32 0.0, %v495
        %497 = vmatmul.f32.gmra.mxu0 %v369
        %v498 = vpop.f32.mrf.mxu0
        %v499 = vadd.f32 0.0, %v498
        %500 = vmatmul.f32.gmra.mxu0 %v372
        %v501 = vpop.f32.mrf.mxu0
        %v502 = vadd.f32 0.0, %v501
        %503 = vmatmul.f32.gmra.mxu0 %v375
        %v504 = vpop.f32.mrf.mxu0
        %v505 = vadd.f32 0.0, %v504
        %506 = vmatmul.f32.gmra.mxu0 %v378
        %v507 = vpop.f32.mrf.mxu0
        %v508 = vadd.f32 0.0, %v507
        %509 = vmatmul.f32.gmra.mxu0 %v381
        %v510 = vpop.f32.mrf.mxu0
        %v511 = vadd.f32 0.0, %v510
        %512 = vmatmul.f32.gmra.mxu0 %v384
        %v513 = vpop.f32.mrf.mxu0
        %v514 = vadd.f32 0.0, %v513
        %515 = vmatmul.f32.gmra.mxu0 %v387
        %v516 = vpop.f32.mrf.mxu0
        %v517 = vadd.f32 0.0, %v516
        %518 = vmatmul.f32.gmra.mxu0 %v390
        %v519 = vpop.f32.mrf.mxu0
        %v520 = vadd.f32 0.0, %v519
        %521 = vmatmul.f32.gmra.mxu0 %v393
        %v522 = vpop.f32.mrf.mxu0
        %v523 = vadd.f32 0.0, %v522
        %524 = vmatmul.f32.gmra.mxu0 %v396
        %v525 = vpop.f32.mrf.mxu0
        %v526 = vadd.f32 0.0, %v525
        %527 = vdwg.mxu0
        %529 = vset.pattern.permute.xlu0 0
        %530 = vperm.xlu0 %529, %v306
        %v531 = vpop.permute.xlu0 %530
        %534 = vset.pattern.permute.xlu0 0
        %535 = vperm.xlu0 %534, %v307
        %v536 = vpop.permute.xlu0 %535
        %539 = vset.pattern.permute.xlu0 0
        %540 = vperm.xlu0 %539, %v308
        %v541 = vpop.permute.xlu0 %540
        %544 = vset.pattern.permute.xlu0 0
        %545 = vperm.xlu0 %544, %v309
        %v546 = vpop.permute.xlu0 %545
        %549 = vset.pattern.permute.xlu0 0
        %550 = vperm.xlu0 %549, %v310
        %v551 = vpop.permute.xlu0 %550
        %554 = vset.pattern.permute.xlu0 0
        %555 = vperm.xlu0 %554, %v311
        %v556 = vpop.permute.xlu0 %555
        %559 = vset.pattern.permute.xlu0 0
        %560 = vperm.xlu0 %559, %v312
        %v561 = vpop.permute.xlu0 %560
        %564 = vset.pattern.permute.xlu0 0
        %565 = vperm.xlu0 %564, %v313
        %v566 = vpop.permute.xlu0 %565
        %v568 = vadd.f32 %v416, %v531
        %v569 = vadd.f32 %v481, %v531
        %v570 = vadd.f32 %v419, %v536
        %v571 = vadd.f32 %v484, %v536
        %v572 = vadd.f32 %v422, %v541
        %v573 = vadd.f32 %v487, %v541
        %v574 = vadd.f32 %v425, %v546
        %v575 = vadd.f32 %v490, %v546
        %v576 = vadd.f32 %v428, %v551
        %v577 = vadd.f32 %v493, %v551
        %v578 = vadd.f32 %v431, %v556
        %v579 = vadd.f32 %v496, %v556
        %v580 = vadd.f32 %v434, %v561
        %v581 = vadd.f32 %v499, %v561
        %v582 = vadd.f32 %v437, %v566
        %v583 = vadd.f32 %v502, %v566
        %v584 = vtanh.pop %v568
        %v585 = vtanh.pop %v569
        %v586 = vtanh.pop %v570
        %v587 = vtanh.pop %v571
        %v588 = vtanh.pop %v572
        %v589 = vtanh.pop %v573
        %v590 = vtanh.pop %v574
        %v591 = vtanh.pop %v575
        %v592 = vtanh.pop %v576
        %v593 = vtanh.pop %v577
        %v594 = vtanh.pop %v578
        %v595 = vtanh.pop %v579
        %v596 = vtanh.pop %v580
        %v597 = vtanh.pop %v581
        %v598 = vtanh.pop %v582
        %v599 = vtanh.pop %v583
        %v600 = vld [vmem:[%s3] sm:$0xff]
        %v601 = vld [vmem:[%s3 + $0x8] sm:$0xff]
        %603 = vset.pattern.permute.xlu0 0
        %604 = vperm.xlu0 %603, %v322
        %v605 = vpop.permute.xlu0 %604
        %608 = vset.pattern.permute.xlu0 0
        %609 = vperm.xlu0 %608, %v323
        %v610 = vpop.permute.xlu0 %609
        %vm612 = vcmask 523264
        %v614 = vsel %vm612, %v600, 0
        %v617 = vsel %vm612, %v601, 0
        %619 = vmatpush.msra.mxu0 0.0
        %620 = vmatpush.msra.mxu0 0.0
        %621 = vmatpush.msra.mxu0 0.0
        %622 = vmatpush.msra.mxu0 0.0
        %623 = vmatpush.msra.mxu0 0.0
        %624 = vmatpush.msra.mxu0 0.0
        %625 = vmatpush.msra.mxu0 0.0
        %626 = vmatpush.msra.mxu0 0.0
        %627 = vmatpush.msra.mxu0 %v598
        %628 = vmatpush.msra.mxu0 %v596
        %629 = vmatpush.msra.mxu0 %v594
        %630 = vmatpush.msra.mxu0 %v592
        %631 = vmatpush.msra.mxu0 %v590
        %632 = vmatpush.msra.mxu0 %v588
        %633 = vmatpush.msra.mxu0 %v586
        %634 = vmatpush.msra.mxu0 %v584
        %635 = vmatmul.f32.gmra.mxu0 %v614
        %v636 = vpop.f32.mrf.mxu0
        %v637 = vadd.f32 %v605, %v636
        %638 = vmatmul.f32.gmra.mxu0 %v617
        %v639 = vpop.f32.mrf.mxu0
        %v640 = vadd.f32 %v610, %v639
        %641 = vdwg.mxu0
        %642 = vmatpush.msra.mxu0 0.0
        %643 = vmatpush.msra.mxu0 0.0
        %644 = vmatpush.msra.mxu0 0.0
        %645 = vmatpush.msra.mxu0 0.0
        %646 = vmatpush.msra.mxu0 0.0
        %647 = vmatpush.msra.mxu0 0.0
        %648 = vmatpush.msra.mxu0 0.0
        %649 = vmatpush.msra.mxu0 0.0
        %650 = vmatpush.msra.mxu0 %v599
        %651 = vmatpush.msra.mxu0 %v597
        %652 = vmatpush.msra.mxu0 %v595
        %653 = vmatpush.msra.mxu0 %v593
        %654 = vmatpush.msra.mxu0 %v591
        %655 = vmatpush.msra.mxu0 %v589
        %656 = vmatpush.msra.mxu0 %v587
        %657 = vmatpush.msra.mxu0 %v585
        %658 = vmatmul.f32.gmra.mxu0 %v614
        %v659 = vpop.f32.mrf.mxu0
        %v660 = vadd.f32 %v605, %v659
        %661 = vmatmul.f32.gmra.mxu0 %v617
        %v662 = vpop.f32.mrf.mxu0
        %v663 = vadd.f32 %v610, %v662
        %664 = vdwg.mxu0
        %v665 = vmul.f32 %v640, 1.442695
        %v666 = vpow.pop %v665
        %v667 = vmul.f32 %v663, 1.442695
        %v668 = vpow.pop %v667
        %v669 = vmul.f32 %v666, %v304
        %v670 = vmul.f32 %v668, %v305
        %v671 = vadd.f32 %v637, %v669
        %v672 = vadd.f32 %v660, %v670
        %v673 = vmax.f32 %v671, -1.0
        %v674 = vmax.f32 %v672, -1.0
        %v675 = vmin.f32 %v673, 1.0
        %v676 = vmin.f32 %v674, 1.0
        %v677 = vld [vmem:[%s4] sm:$0xff]
        %v678 = vld [vmem:[%s4 + $0x8] sm:$0xff]
        %v679 = vld [vmem:[%s4 + $0x10] sm:$0xff]
        %v680 = vld [vmem:[%s4 + $0x18] sm:$0xff]
        %v681 = vld [vmem:[%s4 + $0x20] sm:$0xff]
        %v682 = vld [vmem:[%s4 + $0x28] sm:$0xff]
        %v683 = vld [vmem:[%s4 + $0x30] sm:$0xff]
        %v684 = vld [vmem:[%s4 + $0x38] sm:$0xff]
        %vm685 = vcmask 64512
        %v687 = vsel %vm685, %v677, 0
        %v690 = vsel %vm685, %v678, 0
        %v693 = vsel %vm685, %v679, 0
        %v696 = vsel %vm685, %v680, 0
        %v699 = vsel %vm685, %v681, 0
        %v702 = vsel %vm685, %v682, 0
        %v705 = vsel %vm685, %v683, 0
        %v708 = vsel %vm685, %v684, 0
        %710 = vmatpush.msra.mxu0 0.0
        %711 = vmatpush.msra.mxu0 0.0
        %712 = vmatpush.msra.mxu0 0.0
        %713 = vmatpush.msra.mxu0 0.0
        %714 = vmatpush.msra.mxu0 0.0
        %715 = vmatpush.msra.mxu0 0.0
        %716 = vmatpush.msra.mxu0 0.0
        %717 = vmatpush.msra.mxu0 0.0
        %718 = vmatpush.msra.mxu0 0.0
        %719 = vmatpush.msra.mxu0 0.0
        %720 = vmatpush.msra.mxu0 0.0
        %721 = vmatpush.msra.mxu0 0.0
        %722 = vmatpush.msra.mxu0 0.0
        %723 = vmatpush.msra.mxu0 0.0
        %724 = vmatpush.msra.mxu0 0.0
        %725 = vmatpush.msra.mxu0 %v675
        %726 = vmatmul.f32.gmra.mxu0 %v687
        %v727 = vpop.f32.mrf.mxu0
        %v728 = vadd.f32 0.0, %v727
        %729 = vmatmul.f32.gmra.mxu0 %v690
        %v730 = vpop.f32.mrf.mxu0
        %v731 = vadd.f32 0.0, %v730
        %732 = vmatmul.f32.gmra.mxu0 %v693
        %v733 = vpop.f32.mrf.mxu0
        %v734 = vadd.f32 0.0, %v733
        %735 = vmatmul.f32.gmra.mxu0 %v696
        %v736 = vpop.f32.mrf.mxu0
        %v737 = vadd.f32 0.0, %v736
        %738 = vmatmul.f32.gmra.mxu0 %v699
        %v739 = vpop.f32.mrf.mxu0
        %v740 = vadd.f32 0.0, %v739
        %741 = vmatmul.f32.gmra.mxu0 %v702
        %v742 = vpop.f32.mrf.mxu0
        %v743 = vadd.f32 0.0, %v742
        %744 = vmatmul.f32.gmra.mxu0 %v705
        %v745 = vpop.f32.mrf.mxu0
        %v746 = vadd.f32 0.0, %v745
        %747 = vmatmul.f32.gmra.mxu0 %v708
        %v748 = vpop.f32.mrf.mxu0
        %v749 = vadd.f32 0.0, %v748
        %750 = vdwg.mxu0
        %751 = vmatpush.msra.mxu0 0.0
        %752 = vmatpush.msra.mxu0 0.0
        %753 = vmatpush.msra.mxu0 0.0
        %754 = vmatpush.msra.mxu0 0.0
        %755 = vmatpush.msra.mxu0 0.0
        %756 = vmatpush.msra.mxu0 0.0
        %757 = vmatpush.msra.mxu0 0.0
        %758 = vmatpush.msra.mxu0 0.0
        %759 = vmatpush.msra.mxu0 0.0
        %760 = vmatpush.msra.mxu0 0.0
        %761 = vmatpush.msra.mxu0 0.0
        %762 = vmatpush.msra.mxu0 0.0
        %763 = vmatpush.msra.mxu0 0.0
        %764 = vmatpush.msra.mxu0 0.0
        %765 = vmatpush.msra.mxu0 0.0
        %766 = vmatpush.msra.mxu0 %v676
        %767 = vmatmul.f32.gmra.mxu0 %v687
        %v768 = vpop.f32.mrf.mxu0
        %v769 = vadd.f32 0.0, %v768
        %770 = vmatmul.f32.gmra.mxu0 %v690
        %v771 = vpop.f32.mrf.mxu0
        %v772 = vadd.f32 0.0, %v771
        %773 = vmatmul.f32.gmra.mxu0 %v693
        %v774 = vpop.f32.mrf.mxu0
        %v775 = vadd.f32 0.0, %v774
        %776 = vmatmul.f32.gmra.mxu0 %v696
        %v777 = vpop.f32.mrf.mxu0
        %v778 = vadd.f32 0.0, %v777
        %779 = vmatmul.f32.gmra.mxu0 %v699
        %v780 = vpop.f32.mrf.mxu0
        %v781 = vadd.f32 0.0, %v780
        %782 = vmatmul.f32.gmra.mxu0 %v702
        %v783 = vpop.f32.mrf.mxu0
        %v784 = vadd.f32 0.0, %v783
        %785 = vmatmul.f32.gmra.mxu0 %v705
        %v786 = vpop.f32.mrf.mxu0
        %v787 = vadd.f32 0.0, %v786
        %788 = vmatmul.f32.gmra.mxu0 %v708
        %v789 = vpop.f32.mrf.mxu0
        %v790 = vadd.f32 0.0, %v789
        %791 = vdwg.mxu0
        %v792 = vadd.f32 %v440, %v728
        %v793 = vadd.f32 %v505, %v769
        %v794 = vadd.f32 %v443, %v731
        %v795 = vadd.f32 %v508, %v772
        %v796 = vadd.f32 %v446, %v734
        %v797 = vadd.f32 %v511, %v775
        %v798 = vadd.f32 %v449, %v737
        %v799 = vadd.f32 %v514, %v778
        %v800 = vadd.f32 %v452, %v740
        %v801 = vadd.f32 %v517, %v781
        %v802 = vadd.f32 %v455, %v743
        %v803 = vadd.f32 %v520, %v784
        %v804 = vadd.f32 %v458, %v746
        %v805 = vadd.f32 %v523, %v787
        %v806 = vadd.f32 %v461, %v749
        %v807 = vadd.f32 %v526, %v790
        %809 = vset.pattern.permute.xlu0 0
        %810 = vperm.xlu0 %809, %v314
        %v811 = vpop.permute.xlu0 %810
        %814 = vset.pattern.permute.xlu0 0
        %815 = vperm.xlu0 %814, %v315
        %v816 = vpop.permute.xlu0 %815
        %819 = vset.pattern.permute.xlu0 0
        %820 = vperm.xlu0 %819, %v316
        %v821 = vpop.permute.xlu0 %820
        %824 = vset.pattern.permute.xlu0 0
        %825 = vperm.xlu0 %824, %v317
        %v826 = vpop.permute.xlu0 %825
        %829 = vset.pattern.permute.xlu0 0
        %830 = vperm.xlu0 %829, %v318
        %v831 = vpop.permute.xlu0 %830
        %834 = vset.pattern.permute.xlu0 0
        %835 = vperm.xlu0 %834, %v319
        %v836 = vpop.permute.xlu0 %835
        %839 = vset.pattern.permute.xlu0 0
        %840 = vperm.xlu0 %839, %v320
        %v841 = vpop.permute.xlu0 %840
        %844 = vset.pattern.permute.xlu0 0
        %845 = vperm.xlu0 %844, %v321
        %v846 = vpop.permute.xlu0 %845
        %v848 = vadd.f32 %v792, %v811
        %v849 = vadd.f32 %v793, %v811
        %v850 = vadd.f32 %v794, %v816
        %v851 = vadd.f32 %v795, %v816
        %v852 = vadd.f32 %v796, %v821
        %v853 = vadd.f32 %v797, %v821
        %v854 = vadd.f32 %v798, %v826
        %v855 = vadd.f32 %v799, %v826
        %v856 = vadd.f32 %v800, %v831
        %v857 = vadd.f32 %v801, %v831
        %v858 = vadd.f32 %v802, %v836
        %v859 = vadd.f32 %v803, %v836
        %v860 = vadd.f32 %v804, %v841
        %v861 = vadd.f32 %v805, %v841
        %v862 = vadd.f32 %v806, %v846
        %v863 = vadd.f32 %v807, %v846
        %v864 = vmax.f32 %v848, 0.0
        %v865 = vmax.f32 %v849, 0.0
        %v866 = vmax.f32 %v850, 0.0
        %v867 = vmax.f32 %v851, 0.0
        %v868 = vmax.f32 %v852, 0.0
        %v869 = vmax.f32 %v853, 0.0
        %v870 = vmax.f32 %v854, 0.0
        %v871 = vmax.f32 %v855, 0.0
        %v872 = vmax.f32 %v856, 0.0
        %v873 = vmax.f32 %v857, 0.0
        %v874 = vmax.f32 %v858, 0.0
        %v875 = vmax.f32 %v859, 0.0
        %v876 = vmax.f32 %v860, 0.0
        %v877 = vmax.f32 %v861, 0.0
        %v878 = vmax.f32 %v862, 0.0
        %v879 = vmax.f32 %v863, 0.0
        %881 = vset.pattern.permute.xlu0 0
        %882 = vperm.xlu0 %881, %v324
        %v883 = vpop.permute.xlu0 %882
        %886 = vset.pattern.permute.xlu0 0
        %887 = vperm.xlu0 %886, %v325
        %v888 = vpop.permute.xlu0 %887
        %891 = vset.pattern.permute.xlu0 0
        %892 = vperm.xlu0 %891, %v326
        %v893 = vpop.permute.xlu0 %892
        %896 = vset.pattern.permute.xlu0 0
        %897 = vperm.xlu0 %896, %v327
        %v898 = vpop.permute.xlu0 %897
        %901 = vset.pattern.permute.xlu0 0
        %902 = vperm.xlu0 %901, %v328
        %v903 = vpop.permute.xlu0 %902
        %906 = vset.pattern.permute.xlu0 0
        %907 = vperm.xlu0 %906, %v329
        %v908 = vpop.permute.xlu0 %907
        %911 = vset.pattern.permute.xlu0 0
        %912 = vperm.xlu0 %911, %v330
        %v913 = vpop.permute.xlu0 %912
        %916 = vset.pattern.permute.xlu0 0
        %917 = vperm.xlu0 %916, %v331
        %v918 = vpop.permute.xlu0 %917
        %v920 = vmul.f32 %v864, %v883
        %v921 = vmul.f32 %v865, %v883
        %v922 = vmul.f32 %v866, %v888
        %v923 = vmul.f32 %v867, %v888
        %v924 = vmul.f32 %v868, %v893
        %v925 = vmul.f32 %v869, %v893
        %v926 = vmul.f32 %v870, %v898
        %v927 = vmul.f32 %v871, %v898
        %v928 = vmul.f32 %v872, %v903
        %v929 = vmul.f32 %v873, %v903
        %v930 = vmul.f32 %v874, %v908
        %v931 = vmul.f32 %v875, %v908
        %v932 = vmul.f32 %v876, %v913
        %v933 = vmul.f32 %v877, %v913
        %v934 = vmul.f32 %v878, %v918
        %v935 = vmul.f32 %v879, %v918
        %v936 = vadd.f32 %v920, %v922
        %v937 = vadd.f32 %v936, %v924
        %v938 = vadd.f32 %v937, %v926
        %v939 = vadd.f32 %v938, %v928
        %v940 = vadd.f32 %v939, %v930
        %v941 = vadd.f32 %v940, %v932
        %v942 = vadd.f32 %v941, %v934
        %v943 = vrot.slane %v942, 4
        %v944 = vadd.f32 %v942, %v943
        %v945 = vrot.slane %v944, 2
        %v946 = vadd.f32 %v944, %v945
        %v947 = vrot.slane %v946, 1
        %v948 = vadd.f32 %v946, %v947
        %v949 = vadd.f32 %v921, %v923
        %v950 = vadd.f32 %v949, %v925
        %v951 = vadd.f32 %v950, %v927
        %v952 = vadd.f32 %v951, %v929
        %v953 = vadd.f32 %v952, %v931
        %v954 = vadd.f32 %v953, %v933
        %v955 = vadd.f32 %v954, %v935
        %v956 = vrot.slane %v955, 4
        %v957 = vadd.f32 %v955, %v956
        %v958 = vrot.slane %v957, 2
        %v959 = vadd.f32 %v957, %v958
        %v960 = vrot.slane %v959, 1
        %v961 = vadd.f32 %v959, %v960
        %963 = vset.pattern.permute.xlu0 0
        %964 = vperm.xlu0 %963, %v332
        %v965 = vpop.permute.xlu0 %964
        %v967 = vadd.f32 %v948, %v965
        %v968 = vadd.f32 %v961, %v965
        %v969 = vsub.f32 0.0, %v967
        %v970 = vsub.f32 0.0, %v968
        %v973 = vrot.slane %v970, 7
        %vm974 = vcmask 1040384
        %v975 = vsel %vm974, %v969, %v973
        %v977 = vlaneseq
        %vm978 = vcmp.ge.s32.totalorder %v977, 0
        %vm979 = vcmp.lt.s32.totalorder %v977, 256
        %vm980 = vmand %vm978, %vm979
        %981 = vst.msk [vmem:[%s291] sm:$0x3] %vm980, %v975
        %s982 = sand.u32 %s164, 1
        %s983 = scalar_lea.sflag [#allocation4], %s982
        %s984 = sand.u32 %s164, 1
        %s985 = smul.addr %s984, 2
        %s986 = scalar_lea.vmem [#allocation3], %s985
        // Predicated region
        $region68: #{tpu_custom_call.1} parent=62 // pred_check
          %p987 = pneg %p174
        $region69: #{tpu_custom_call.1} parent=62 // pred_check_branch
          %989 = sbr.rel (%p987) target = $region71
        $region70: #{tpu_custom_call.1} parent=62 // pred_region
          %s990 = smul.u32 2, %s20
          %992 = vsyncadd %s983, 0
          %s993 = scalar_lea.hbm %s6, %s990
          %s995 = sshll.u32 %s986, 4
          %s996 = int_to_ptr.vmem [resolvable:$true] %s995
          %s997 = sshll.u32 %s993, 4
          %s998 = int_to_ptr.hbm [resolvable:$true] %s997
          %1000 = dma.vmem_to_hbm [thread:$0]  %s996, 32, %s998, %s983
        $region71: #{tpu_custom_call.1} parent=62 // pred_fallthru
          _
      $region63: #{tpu_custom_call.1} parent=5 // pred_fallthru
        _
      %p1001 = scmp.le.s32.totalorder 2, %s15
      // Predicated region
      $region72: #{tpu_custom_call.1} parent=5 // pred_check
        %p1002 = pneg %p1001
      $region73: #{tpu_custom_call.1} parent=5 // pred_check_branch
        %1004 = sbr.rel (%p1002) target = $region75
      $region74: #{tpu_custom_call.1} parent=5 // pred_region
        %s1005 = ssub.s32 %s15, 2
        // Predicated region
        $region76: #{tpu_custom_call.1} parent=74 // pred_check
          %p1006 = pneg %p180
        $region77: #{tpu_custom_call.1} parent=74 // pred_check_branch
          %1008 = sbr.rel (%p1006) target = $region79
        $region78: #{tpu_custom_call.1} parent=74 // pred_region
          %s1009 = sand.u32 %s165, 1
          %s1010 = scalar_lea.sflag [#allocation4], %s1009
          %s1011 = sand.u32 %s165, 1
          %s1012 = smul.addr %s1011, 2
          %s1013 = scalar_lea.vmem [#allocation3], %s1012
          %1015 = dma.done %s1010, 32
        $region79: #{tpu_custom_call.1} parent=74 // pred_fallthru
          _
      $region75: #{tpu_custom_call.1} parent=5 // pred_fallthru
        _
    $region6: #{tpu_custom_call.1} parent=1 // loop_footer
      %s19 = sadd.s32 1, %s15
    $region7: #{tpu_custom_call.1} parent=1 // loop_footer_branch
      %14 = sbr.rel target = $region3
    $region8: #{tpu_custom_call.1} parent=1 // loop_exit
      _
    %1016 = vsyncpa [#allocation4], 1
    %s1017 = scalar_lea.sflag [#allocation4], 1
    %1018 = vsyncpa %s1017, 1

</llo_original>
